<compile_context>
chip_gen: v7x
topology: tpu7x:2x2x1
jax: 0.10.0
libtpu: 0.0.40
codegen_flags: <defaults>
</compile_context>

<pallas_src>
import functools
import math

import jax
import jax.numpy as jnp
from jax import lax
from jax.experimental import pallas as pl
from jax.experimental.pallas import tpu as pltpu


def mlp_kernel(xT_ref, w1_ref, b1_ref, w2_ref, b2_ref, w3_ref, b3_ref, o_ref,
               *, cw, n_chunks):
    # Hoist resident weights/biases (and their broadcasts) out of the chunk loop;
    # JAX does not CSE broadcast_in_dim, so re-emitting them per chunk is wasted VALU.
    w1 = w1_ref[...]        # (H1, D)   PyTorch (out, in) layout
    b1 = b1_ref[...]        # (H1, 1)   broadcasts across lanes
    w2 = w2_ref[...]        # (H2, H1)
    b2 = b2_ref[...]        # (H2, 1)
    w3 = w3_ref[...]        # (1, H2)   row vector -> MXU dot for fc3
    b3 = b3_ref[0]          # scalar from SMEM

    def chunk_body(j, carry):
        start = pl.multiple_of(j * cw, cw)
        xc = xT_ref[:, pl.ds(start, cw)]                     # (D, cw) lane-dense

        # fc1 on the MXU (K = input_dim is tiny; MXU has ample slack).
        h1 = jnp.dot(w1, xc, preferred_element_type=jnp.float32) + b1
        h1 = jnp.maximum(h1, 0.0)                            # (H1, cw)

        # fc2: 25x25 contraction, lane-dense N = cw -> MXU.
        h2 = jnp.dot(w2, h1, preferred_element_type=jnp.float32) + b2
        h2 = jnp.maximum(h2, 0.0)                            # (H2, cw)

        # fc3 on the MXU: (1,25)@(25,cw) instead of VPU mul + XLU sublane reduce.
        z = jnp.dot(w3, h2, preferred_element_type=jnp.float32) + b3   # (1, cw)
        o_ref[:, pl.ds(start, cw)] = jax.nn.sigmoid(z)       # lane-dense store
        return carry

    # Static trip count; unroll short loops for LLO scheduling visibility.
    lax.fori_loop(0, n_chunks, chunk_body, 0, unroll=(n_chunks <= 8))


def ours_neural_2d(x, params, *, tb=16384, cw=256):
    """Forward pass of OursNeural2D as one fused Pallas kernel.

    x: (B, input_dim) float32
    params (PyTorch layout): w1 (25, input_dim), b1 (25,), w2 (25, 25), b2 (25,),
                             w3 (1, 25), b3 (1,)
    Returns (B, 1) float32.
    """
    B, D = x.shape
    assert cw % 128 == 0, "compute chunk must be a multiple of the 128-lane width"
    assert tb % cw == 0

    w1 = params["w1"]                      # (25, D)
    b1 = params["b1"].reshape(-1, 1)       # (25, 1)
    w2 = params["w2"]                      # (25, 25)
    b2 = params["b2"].reshape(-1, 1)       # (25, 1)
    w3 = params["w3"].reshape(1, -1)       # (1, 25) row
    b3 = params["b3"].reshape(-1)          # (1,) -> SMEM scalar
    H1, H2 = w1.shape[0], w2.shape[0]

    # --- Tiling: big DMA blocks, >=2 parallel grid blocks when possible (v7x). ---
    n_chunks_total = -(-B // cw)                       # ceil(B / cw)
    max_chunks_per_block = max(1, tb // cw)
    num_blocks = max(1, -(-n_chunks_total // max_chunks_per_block))
    if n_chunks_total >= 2:
        num_blocks = max(num_blocks, 2)                # keep both v7x TCs busy
    chunks_per_block = -(-n_chunks_total // num_blocks)
    tb_actual = chunks_per_block * cw
    b_pad = num_blocks * tb_actual

    # Batch on the lane axis; zero-pad to the tiled extent (padded cols sliced off).
    xT = jnp.pad(x, ((0, b_pad - B), (0, 0))).T        # (D, b_pad)

    kernel = functools.partial(mlp_kernel, cw=cw, n_chunks=chunks_per_block)
    full = lambda shape: pl.BlockSpec(shape, lambda i: (0, 0))
    y = pl.pallas_call(
        kernel,
        out_shape=jax.ShapeDtypeStruct((1, b_pad), jnp.float32),
        grid_spec=pltpu.PrefetchScalarGridSpec(
            num_scalar_prefetch=0,
            grid=(num_blocks,),
            in_specs=[
                pl.BlockSpec((D, tb_actual), lambda i: (0, i)),     # x slab, lane-dense
                full((H1, D)),                                      # w1 (resident)
                full((H1, 1)),                                      # b1
                full((H2, H1)),                                     # w2
                full((H2, 1)),                                      # b2
                full((1, H2)),                                      # w3 row
                pl.BlockSpec(memory_space=pltpu.MemorySpace.SMEM),  # b3 scalar
            ],
            out_specs=pl.BlockSpec((1, tb_actual), lambda i: (0, i)),  # lane-dense out
        ),
        compiler_params=pltpu.CompilerParams(
            dimension_semantics=("parallel",)          # megacore sharding on v7x
        ),
    )(xT, w1, b1, w2, b2, w3, b3)
    return y[:, :B].T                                  # back to (B, 1)


def init_params(key, input_dim):
    """Deterministic init mimicking PyTorch nn.Linear (U(-1/sqrt(fan_in), +)),
    with weights in PyTorch's native (out_features, in_features) layout."""
    dims = [(input_dim, 25), (25, 25), (25, 1)]
    params = {}
    keys = jax.random.split(key, 2 * len(dims))
    for idx, (fan_in, fan_out) in enumerate(dims):
        bound = 1.0 / math.sqrt(fan_in)
        params[f"w{idx + 1}"] = jax.random.uniform(
            keys[2 * idx], (fan_out, fan_in), minval=-bound, maxval=bound,
            dtype=jnp.float32)
        params[f"b{idx + 1}"] = jax.random.uniform(
            keys[2 * idx + 1], (fan_out,), minval=-bound, maxval=bound,
            dtype=jnp.float32)
    return params


def reference_forward(x, p):
    h1 = jnp.maximum(x @ p["w1"].T + p["b1"], 0.0)
    h2 = jnp.maximum(h1 @ p["w2"].T + p["b2"], 0.0)
    return jax.nn.sigmoid(h2 @ p["w3"].T + p["b3"])


if __name__ == "__main__":
    key = jax.random.PRNGKey(0)
    k_x, k_p = jax.random.split(key)

    input_dim = 2          # "2D" input features
    batch = 512            # two 256-lane chunks -> 2 parallel grid blocks

    x = jax.random.normal(k_x, (batch, input_dim), dtype=jnp.float32)
    params = init_params(k_p, input_dim)

    out = jax.block_until_ready(ours_neural_2d(x, params))
    ref = reference_forward(x, params)
    assert out.shape == (batch, 1)
    assert jnp.allclose(out, ref, atol=1e-5, rtol=1e-5), "mismatch vs pure-JAX reference"

    # Batch-padding path (non-lane-aligned batch, single grid block).
    x2 = jax.random.normal(k_x, (100, input_dim), dtype=jnp.float32)
    out2 = jax.block_until_ready(ours_neural_2d(x2, params))
    ref2 = reference_forward(x2, params)
    assert out2.shape == (100, 1)
    assert jnp.allclose(out2, ref2, atol=1e-5, rtol=1e-5), "mismatch (padded batch)"

    # Multi-chunk-per-block path (inner fori_loop exercised, ragged tail padding).
    x3 = jax.random.normal(k_x, (3000, input_dim), dtype=jnp.float32)
    out3 = jax.block_until_ready(ours_neural_2d(x3, params, tb=1024))
    ref3 = reference_forward(x3, params)
    assert out3.shape == (3000, 1)
    assert jnp.allclose(out3, ref3, atol=1e-5, rtol=1e-5), "mismatch (chunk loop)"

    print("KERNEL_OK")
</pallas_src>

<mosaic_0001>
module attributes {stable_mosaic.version = 11 : i64} {
  func.func @mlp_kernel(%arg0: i32, %arg1: memref<2x256xf32, #tpu.memory_space<vmem>>, %arg2: memref<25x2xf32, #tpu.memory_space<vmem>>, %arg3: memref<25x1xf32, #tpu.memory_space<vmem>>, %arg4: memref<25x25xf32, #tpu.memory_space<vmem>>, %arg5: memref<25x1xf32, #tpu.memory_space<vmem>>, %arg6: memref<1x25xf32, #tpu.memory_space<vmem>>, %arg7: memref<1xf32, #tpu.memory_space<smem>>, %arg8: memref<1x256xf32, #tpu.memory_space<vmem>>) attributes {dimension_semantics = [#tpu.dimension_semantics<parallel>], iteration_bounds = array<i64: 2>, scalar_prefetch = 0 : i64, scratch_operands = 0 : i64, tpu.core_type = #tpu.core_type<tc>, window_params = [{transform_indices = @transform_0, window_bounds = array<i64: 2, 256>}, {pipeline_mode = #tpu.pipeline_mode<synchronous>, transform_indices = @transform_1, window_bounds = array<i64: 25, 2>}, {pipeline_mode = #tpu.pipeline_mode<synchronous>, transform_indices = @transform_2, window_bounds = array<i64: 25, 1>}, {pipeline_mode = #tpu.pipeline_mode<synchronous>, transform_indices = @transform_3, window_bounds = array<i64: 25, 25>}, {pipeline_mode = #tpu.pipeline_mode<synchronous>, transform_indices = @transform_4, window_bounds = array<i64: 25, 1>}, {pipeline_mode = #tpu.pipeline_mode<synchronous>, transform_indices = @transform_5, window_bounds = array<i64: 1, 25>}, {transform_indices = @transform_6, window_bounds = array<i64: 1>}, {transform_indices = @transform_7, window_bounds = array<i64: 1, 256>}]} {
    %c0 = arith.constant 0 : index
    %c0_0 = arith.constant 0 : index
    %0 = vector.load %arg2[%c0, %c0_0] : memref<25x2xf32, #tpu.memory_space<vmem>>, vector<25x2xf32>
    %c0_1 = arith.constant 0 : index
    %c0_2 = arith.constant 0 : index
    %1 = vector.load %arg3[%c0_1, %c0_2] : memref<25x1xf32, #tpu.memory_space<vmem>>, vector<25x1xf32>
    %c0_3 = arith.constant 0 : index
    %c0_4 = arith.constant 0 : index
    %2 = vector.load %arg4[%c0_3, %c0_4] : memref<25x25xf32, #tpu.memory_space<vmem>>, vector<25x25xf32>
    %c0_5 = arith.constant 0 : index
    %c0_6 = arith.constant 0 : index
    %3 = vector.load %arg5[%c0_5, %c0_6] : memref<25x1xf32, #tpu.memory_space<vmem>>, vector<25x1xf32>
    %c0_7 = arith.constant 0 : index
    %c0_8 = arith.constant 0 : index
    %4 = vector.load %arg6[%c0_7, %c0_8] : memref<1x25xf32, #tpu.memory_space<vmem>>, vector<1x25xf32>
    %c0_9 = arith.constant 0 : index
    %5 = memref.load %arg7[%c0_9] : memref<1xf32, #tpu.memory_space<smem>>
    %c0_i32 = arith.constant 0 : i32
    %c256_i32 = arith.constant 256 : i32
    %6 = arith.muli %c0_i32, %c256_i32 : i32
    %7 = tpu.assume_multiple %6, 256 : i32
    %c0_10 = arith.constant 0 : index
    %8 = arith.index_cast %7 : i32 to index
    %9 = vector.load %arg1[%c0_10, %8] : memref<2x256xf32, #tpu.memory_space<vmem>>, vector<2x256xf32>
    %cst = arith.constant dense<0.000000e+00> : vector<25x256xf32>
    %10 = tpu.matmul %0, %9, %cst {dimension_numbers = #tpu.dot_dimension_numbers<[1], [0], [0], [1], [0, 0, 1, 1], [], []>} : vector<25x2xf32>, vector<2x256xf32>, vector<25x256xf32> -> vector<25x256xf32>
    %11 = vector.broadcast %1 : vector<25x1xf32> to vector<25x256xf32>
    %12 = arith.addf %10, %11 : vector<25x256xf32>
    %cst_11 = arith.constant 0.000000e+00 : f32
    %13 = vector.broadcast %cst_11 : f32 to vector<25x256xf32>
    %14 = arith.maximumf %12, %13 : vector<25x256xf32>
    %cst_12 = arith.constant dense<0.000000e+00> : vector<25x256xf32>
    %15 = tpu.matmul %2, %14, %cst_12 {dimension_numbers = #tpu.dot_dimension_numbers<[1], [0], [0], [1], [0, 0, 1, 1], [], []>} : vector<25x25xf32>, vector<25x256xf32>, vector<25x256xf32> -> vector<25x256xf32>
    %16 = vector.broadcast %3 : vector<25x1xf32> to vector<25x256xf32>
    %17 = arith.addf %15, %16 : vector<25x256xf32>
    %cst_13 = arith.constant 0.000000e+00 : f32
    %18 = vector.broadcast %cst_13 : f32 to vector<25x256xf32>
    %19 = arith.maximumf %17, %18 : vector<25x256xf32>
    %cst_14 = arith.constant dense<0.000000e+00> : vector<1x256xf32>
    %20 = tpu.matmul %4, %19, %cst_14 {dimension_numbers = #tpu.dot_dimension_numbers<[1], [0], [0], [1], [0, 0, 1, 1], [], []>} : vector<1x25xf32>, vector<25x256xf32>, vector<1x256xf32> -> vector<1x256xf32>
    %21 = vector.broadcast %5 : f32 to vector<1x256xf32>
    %22 = arith.addf %20, %21 : vector<1x256xf32>
    %23 = arith.negf %22 : vector<1x256xf32>
    %24 = math.exp %23 : vector<1x256xf32>
    %cst_15 = arith.constant 1.000000e+00 : f32
    %25 = vector.broadcast %cst_15 : f32 to vector<1x256xf32>
    %26 = arith.addf %25, %24 : vector<1x256xf32>
    %27 = arith.divf %25, %26 : vector<1x256xf32>
    %c0_16 = arith.constant 0 : index
    %28 = arith.index_cast %7 : i32 to index
    %29 = vector.load %arg8[%c0_16, %28] : memref<1x256xf32, #tpu.memory_space<vmem>>, vector<1x256xf32>
    tpu.vector_store %arg8[%c0_16, %28], %27 {strides = array<i32>} : memref<1x256xf32, #tpu.memory_space<vmem>>, vector<1x256xf32>,
    %c1_i32 = arith.constant 1 : i32
    return
  }
  func.func @transform_0(%arg0: i32) -> (i32, i32) {
    %c0_i32 = arith.constant 0 : i32
    %c0_i32_0 = arith.constant 0 : i32
    return %c0_i32, %arg0 : i32, i32
  }
  func.func @transform_1(%arg0: i32) -> (i32, i32) {
    %c0_i32 = arith.constant 0 : i32
    %c0_i32_0 = arith.constant 0 : i32
    %c0_i32_1 = arith.constant 0 : i32
    return %c0_i32, %c0_i32_0 : i32, i32
  }
  func.func @transform_2(%arg0: i32) -> (i32, i32) {
    %c0_i32 = arith.constant 0 : i32
    %c0_i32_0 = arith.constant 0 : i32
    %c0_i32_1 = arith.constant 0 : i32
    return %c0_i32, %c0_i32_0 : i32, i32
  }
  func.func @transform_3(%arg0: i32) -> (i32, i32) {
    %c0_i32 = arith.constant 0 : i32
    %c0_i32_0 = arith.constant 0 : i32
    %c0_i32_1 = arith.constant 0 : i32
    return %c0_i32, %c0_i32_0 : i32, i32
  }
  func.func @transform_4(%arg0: i32) -> (i32, i32) {
    %c0_i32 = arith.constant 0 : i32
    %c0_i32_0 = arith.constant 0 : i32
    %c0_i32_1 = arith.constant 0 : i32
    return %c0_i32, %c0_i32_0 : i32, i32
  }
  func.func @transform_5(%arg0: i32) -> (i32, i32) {
    %c0_i32 = arith.constant 0 : i32
    %c0_i32_0 = arith.constant 0 : i32
    %c0_i32_1 = arith.constant 0 : i32
    return %c0_i32, %c0_i32_0 : i32, i32
  }
  func.func @transform_6(%arg0: i32) -> i32 {
    %c0_i32 = arith.constant 0 : i32
    %c0_i32_0 = arith.constant 0 : i32
    return %c0_i32 : i32
  }
  func.func @transform_7(%arg0: i32) -> (i32, i32) {
    %c0_i32 = arith.constant 0 : i32
    %c0_i32_0 = arith.constant 0 : i32
    return %c0_i32, %arg0 : i32, i32
  }
}

</mosaic_0001>

<llo_original>
// kernel: tpu_custom_call.1
$region0: #{tpu_custom_call.1}
  #allocation0 [shape = 'u32[]', space=smem, size = 0x4, offset = 0x4, fixed_abs, tag = 'smem constant byte address 0x4 - core index']
  #allocation1 [shape = 'u32[144,128]{1,0:T(1,128)}', space=vmem, size = 0x12000, scoped, tag = 'internal scratch']
  #allocation2 [shape = 'f32[1]{0:T(128)S(6)}', space=smem, size = 0x200, scoped, tag = 'scoped memory for tpu_custom_call.1']
  %s0 = inlined_call_operand.vmem [shape: f32[2,512], index: 0, kind: input, shape index: {}]
  %s1 = inlined_call_operand.vmem [shape: f32[25,2], index: 1, kind: input, shape index: {}]
  %s2 = inlined_call_operand.vmem [shape: f32[25,1], index: 2, kind: input, shape index: {}]
  %s3 = inlined_call_operand.vmem [shape: f32[25,25], index: 3, kind: input, shape index: {}]
  %s4 = inlined_call_operand.vmem [shape: f32[25,1], index: 4, kind: input, shape index: {}]
  %s5 = inlined_call_operand.vmem [shape: f32[1,25], index: 5, kind: input, shape index: {}]
  %s6 = inlined_call_operand.<no memory space> [shape: f32[1], index: 6, kind: input, shape index: {}]
  %s7 = inlined_call_operand.hbm [shape: f32[1,512], index: 7, kind: output, shape index: {}]
  %s8 = sld [smem:[#allocation0]]
  $region61: #{tpu_custom_call.1} parent=0
    _
  %s10 = ssub.s32 1, %s8
  %s11 = scalar_select 0, %s10, %s8
  %12 = sst [smem:[#allocation2]] %s6
  $region1: #{tpu_custom_call.1} parent=0
    #allocation3 [shape = 'u8[2048]{0}', space=vmem, size = 0x800, scoped, tag = 'output window, operand 0']
    #allocation4 [shape = 's32[2]{0}', space=sflag, size = 0x8, scoped, tag = 'scoped memory for tpu_custom_call.1']
    %13 = vsyncpa [#allocation4], 0
    %s14 = scalar_lea.sflag [#allocation4], 1
    %15 = vsyncpa %s14, 0
    loop: start=0, step=1, limit=4
    $region2: #{tpu_custom_call.1} parent=1 // loop_pre_header
      _
    $region3: #{tpu_custom_call.1} parent=1 // loop_header
      %s17 = sphi 0, %s21
      %p18 = scmp.ge.s32.totalorder %s17, 4
      %s27 = sphi 0, %s29
      %s30 = sphi 0, %s27
      %s31 = sphi 0, %s30
      %s47 = sphi 0, %s31
      %s51 = sphi 0, %s51
      %s53 = sphi 0, %s51
      %s54 = sphi 0, %s53
      %s68 = sphi 0, %s54
      %s72 = sphi 0, %s72
      %s74 = sphi 0, %s72
      %s75 = sphi 0, %s74
      %s89 = sphi 0, %s75
      %s93 = sphi 0, %s93
      %s95 = sphi 0, %s93
      %s96 = sphi 0, %s95
      %s110 = sphi 0, %s96
      %s114 = sphi 0, %s114
      %s116 = sphi 0, %s114
      %s117 = sphi 0, %s116
      %s131 = sphi 0, %s117
      %s135 = sphi 0, %s135
      %s137 = sphi 0, %s135
      %s138 = sphi 0, %s137
      %s152 = sphi 0, %s138
      %s156 = sphi 0, %s156
      %s158 = sphi 0, %s156
      %s159 = sphi 0, %s158
      %s173 = sphi 0, %s159
      %s179 = sphi 0, %s181
      %s182 = sphi 0, %s179
      %s183 = sphi 0, %s182
      %s199 = sphi 0, %s183
    $region4: #{tpu_custom_call.1} parent=1 // loop_header_branch
      %20 = sbr.rel (%p18) target = $region8
    $region5: #{tpu_custom_call.1} parent=1 // loop_body
      %s22 = ssub.s32 %s17, 1
      %s23 = ssub.s32 %s17, 2
      %s24 = sadd.s32 %s17, 1
      %s25 = ssub.s32 %s17, %s24
      %p26 = scmp.eq.s32.totalorder %s25, 0
      %s28 = sadd.s32 %s27, 1
      %s29 = scalar_select %p26, %s27, %s28
      %p32 = pneg %p26
      %p33 = scmp.eq.s32.totalorder %s17, 1
      %p34 = por %p32, %p33
      %p35 = scmp.ne.s32.totalorder %s27, %s30
      %p36 = scmp.eq.s32.totalorder %s17, 0
      %p37 = por %p35, %p36
      %p38 = scmp.ne.s32.totalorder %s27, %s30
      %p39 = scmp.eq.s32.totalorder %s22, 1
      %p40 = por %p38, %p39
      %p41 = scmp.ne.s32.totalorder %s30, %s31
      %p42 = scmp.eq.s32.totalorder %s22, 0
      %p43 = por %p41, %p42
      %p44 = scmp.ne.s32.totalorder %s30, %s31
      %p45 = scmp.eq.s32.totalorder %s23, 1
      %p46 = por %p44, %p45
      %p48 = scmp.ne.s32.totalorder %s31, %s47
      %p49 = scmp.eq.s32.totalorder %s23, 0
      %p50 = por %p48, %p49
      %s52 = sadd.s32 %s51, 1
      %p55 = scmp.eq.s32.totalorder %s17, 1
      %p56 = scmp.ne.s32.totalorder %s51, %s53
      %p57 = scmp.eq.s32.totalorder %s17, 0
      %p58 = por %p56, %p57
      %p59 = scmp.ne.s32.totalorder %s51, %s53
      %p60 = scmp.eq.s32.totalorder %s22, 1
      %p61 = por %p59, %p60
      %p62 = scmp.ne.s32.totalorder %s53, %s54
      %p63 = scmp.eq.s32.totalorder %s22, 0
      %p64 = por %p62, %p63
      %p65 = scmp.ne.s32.totalorder %s53, %s54
      %p66 = scmp.eq.s32.totalorder %s23, 1
      %p67 = por %p65, %p66
      %p69 = scmp.ne.s32.totalorder %s54, %s68
      %p70 = scmp.eq.s32.totalorder %s23, 0
      %p71 = por %p69, %p70
      %s73 = sadd.s32 %s72, 1
      %p76 = scmp.eq.s32.totalorder %s17, 1
      %p77 = scmp.ne.s32.totalorder %s72, %s74
      %p78 = scmp.eq.s32.totalorder %s17, 0
      %p79 = por %p77, %p78
      %p80 = scmp.ne.s32.totalorder %s72, %s74
      %p81 = scmp.eq.s32.totalorder %s22, 1
      %p82 = por %p80, %p81
      %p83 = scmp.ne.s32.totalorder %s74, %s75
      %p84 = scmp.eq.s32.totalorder %s22, 0
      %p85 = por %p83, %p84
      %p86 = scmp.ne.s32.totalorder %s74, %s75
      %p87 = scmp.eq.s32.totalorder %s23, 1
      %p88 = por %p86, %p87
      %p90 = scmp.ne.s32.totalorder %s75, %s89
      %p91 = scmp.eq.s32.totalorder %s23, 0
      %p92 = por %p90, %p91
      %s94 = sadd.s32 %s93, 1
      %p97 = scmp.eq.s32.totalorder %s17, 1
      %p98 = scmp.ne.s32.totalorder %s93, %s95
      %p99 = scmp.eq.s32.totalorder %s17, 0
      %p100 = por %p98, %p99
      %p101 = scmp.ne.s32.totalorder %s93, %s95
      %p102 = scmp.eq.s32.totalorder %s22, 1
      %p103 = por %p101, %p102
      %p104 = scmp.ne.s32.totalorder %s95, %s96
      %p105 = scmp.eq.s32.totalorder %s22, 0
      %p106 = por %p104, %p105
      %p107 = scmp.ne.s32.totalorder %s95, %s96
      %p108 = scmp.eq.s32.totalorder %s23, 1
      %p109 = por %p107, %p108
      %p111 = scmp.ne.s32.totalorder %s96, %s110
      %p112 = scmp.eq.s32.totalorder %s23, 0
      %p113 = por %p111, %p112
      %s115 = sadd.s32 %s114, 1
      %p118 = scmp.eq.s32.totalorder %s17, 1
      %p119 = scmp.ne.s32.totalorder %s114, %s116
      %p120 = scmp.eq.s32.totalorder %s17, 0
      %p121 = por %p119, %p120
      %p122 = scmp.ne.s32.totalorder %s114, %s116
      %p123 = scmp.eq.s32.totalorder %s22, 1
      %p124 = por %p122, %p123
      %p125 = scmp.ne.s32.totalorder %s116, %s117
      %p126 = scmp.eq.s32.totalorder %s22, 0
      %p127 = por %p125, %p126
      %p128 = scmp.ne.s32.totalorder %s116, %s117
      %p129 = scmp.eq.s32.totalorder %s23, 1
      %p130 = por %p128, %p129
      %p132 = scmp.ne.s32.totalorder %s117, %s131
      %p133 = scmp.eq.s32.totalorder %s23, 0
      %p134 = por %p132, %p133
      %s136 = sadd.s32 %s135, 1
      %p139 = scmp.eq.s32.totalorder %s17, 1
      %p140 = scmp.ne.s32.totalorder %s135, %s137
      %p141 = scmp.eq.s32.totalorder %s17, 0
      %p142 = por %p140, %p141
      %p143 = scmp.ne.s32.totalorder %s135, %s137
      %p144 = scmp.eq.s32.totalorder %s22, 1
      %p145 = por %p143, %p144
      %p146 = scmp.ne.s32.totalorder %s137, %s138
      %p147 = scmp.eq.s32.totalorder %s22, 0
      %p148 = por %p146, %p147
      %p149 = scmp.ne.s32.totalorder %s137, %s138
      %p150 = scmp.eq.s32.totalorder %s23, 1
      %p151 = por %p149, %p150
      %p153 = scmp.ne.s32.totalorder %s138, %s152
      %p154 = scmp.eq.s32.totalorder %s23, 0
      %p155 = por %p153, %p154
      %s157 = sadd.s32 %s156, 1
      %p160 = scmp.eq.s32.totalorder %s17, 1
      %p161 = scmp.ne.s32.totalorder %s156, %s158
      %p162 = scmp.eq.s32.totalorder %s17, 0
      %p163 = por %p161, %p162
      %p164 = scmp.ne.s32.totalorder %s156, %s158
      %p165 = scmp.eq.s32.totalorder %s22, 1
      %p166 = por %p164, %p165
      %p167 = scmp.ne.s32.totalorder %s158, %s159
      %p168 = scmp.eq.s32.totalorder %s22, 0
      %p169 = por %p167, %p168
      %p170 = scmp.ne.s32.totalorder %s158, %s159
      %p171 = scmp.eq.s32.totalorder %s23, 1
      %p172 = por %p170, %p171
      %p174 = scmp.ne.s32.totalorder %s159, %s173
      %p175 = scmp.eq.s32.totalorder %s23, 0
      %p176 = por %p174, %p175
      %s177 = ssub.s32 %s17, %s24
      %p178 = scmp.eq.s32.totalorder %s177, 0
      %s180 = sadd.s32 %s179, 1
      %s181 = scalar_select %p178, %s179, %s180
      %p184 = pneg %p178
      %p185 = scmp.eq.s32.totalorder %s17, 1
      %p186 = por %p184, %p185
      %p187 = scmp.ne.s32.totalorder %s179, %s182
      %p188 = scmp.eq.s32.totalorder %s17, 0
      %p189 = por %p187, %p188
      %p190 = scmp.ne.s32.totalorder %s179, %s182
      %p191 = scmp.eq.s32.totalorder %s22, 1
      %p192 = por %p190, %p191
      %p193 = scmp.ne.s32.totalorder %s182, %s183
      %p194 = scmp.eq.s32.totalorder %s22, 0
      %p195 = por %p193, %p194
      %p196 = scmp.ne.s32.totalorder %s182, %s183
      %p197 = scmp.eq.s32.totalorder %s23, 1
      %p198 = por %p196, %p197
      %p200 = scmp.ne.s32.totalorder %s183, %s199
      %p201 = scmp.eq.s32.totalorder %s23, 0
      %p202 = por %p200, %p201
      %p203 = scmp.le.s32.totalorder 1, %s17
      %p204 = scmp.lt.s32.totalorder %s17, 3
      %p205 = pnand %p203, %p204
      %p206 = pneg %p205
      // Predicated region
      $region9: #{tpu_custom_call.1} parent=5 // pred_check
        _
      $region10: #{tpu_custom_call.1} parent=5 // pred_check_branch
        %208 = sbr.rel (%p205) target = $region12
      $region11: #{tpu_custom_call.1} parent=5 // pred_region
        %s209 = ssub.s32 %s17, 1
        // Predicated region
        $region13: #{tpu_custom_call.1} parent=11 // pred_check
          %p210 = pneg %p64
        $region14: #{tpu_custom_call.1} parent=11 // pred_check_branch
          %212 = sbr.rel (%p210) target = $region16
        $region15: #{tpu_custom_call.1} parent=11 // pred_region
          _
        $region16: #{tpu_custom_call.1} parent=11 // pred_fallthru
          _
        // Predicated region
        $region17: #{tpu_custom_call.1} parent=11 // pred_check
          %p213 = pneg %p85
        $region18: #{tpu_custom_call.1} parent=11 // pred_check_branch
          %215 = sbr.rel (%p213) target = $region20
        $region19: #{tpu_custom_call.1} parent=11 // pred_region
          _
        $region20: #{tpu_custom_call.1} parent=11 // pred_fallthru
          _
        // Predicated region
        $region21: #{tpu_custom_call.1} parent=11 // pred_check
          %p216 = pneg %p106
        $region22: #{tpu_custom_call.1} parent=11 // pred_check_branch
          %218 = sbr.rel (%p216) target = $region24
        $region23: #{tpu_custom_call.1} parent=11 // pred_region
          _
        $region24: #{tpu_custom_call.1} parent=11 // pred_fallthru
          _
        // Predicated region
        $region25: #{tpu_custom_call.1} parent=11 // pred_check
          %p219 = pneg %p127
        $region26: #{tpu_custom_call.1} parent=11 // pred_check_branch
          %221 = sbr.rel (%p219) target = $region28
        $region27: #{tpu_custom_call.1} parent=11 // pred_region
          _
        $region28: #{tpu_custom_call.1} parent=11 // pred_fallthru
          _
        // Predicated region
        $region29: #{tpu_custom_call.1} parent=11 // pred_check
          %p222 = pneg %p148
        $region30: #{tpu_custom_call.1} parent=11 // pred_check_branch
          %224 = sbr.rel (%p222) target = $region32
        $region31: #{tpu_custom_call.1} parent=11 // pred_region
          _
        $region32: #{tpu_custom_call.1} parent=11 // pred_fallthru
          _
        // Predicated region
        $region33: #{tpu_custom_call.1} parent=11 // pred_check
          %p225 = pneg %p169
        $region34: #{tpu_custom_call.1} parent=11 // pred_check_branch
          %227 = sbr.rel (%p225) target = $region36
        $region35: #{tpu_custom_call.1} parent=11 // pred_region
          _
        $region36: #{tpu_custom_call.1} parent=11 // pred_fallthru
          _
      $region12: #{tpu_custom_call.1} parent=5 // pred_fallthru
        _
      %p228 = scmp.lt.s32.totalorder %s17, 2
      // Predicated region
      $region37: #{tpu_custom_call.1} parent=5 // pred_check
        %p229 = pneg %p228
      $region38: #{tpu_custom_call.1} parent=5 // pred_check_branch
        %231 = sbr.rel (%p229) target = $region40
      $region39: #{tpu_custom_call.1} parent=5 // pred_region
        // Predicated region
        $region41: #{tpu_custom_call.1} parent=39 // pred_check
          %p232 = pneg %p37
        $region42: #{tpu_custom_call.1} parent=39 // pred_check_branch
          %234 = sbr.rel (%p232) target = $region44
        $region43: #{tpu_custom_call.1} parent=39 // pred_region
          %s235 = smul.u32 2, %s17
          %p236 = scmp.lt.s32.totalorder %s235, 3
          %s237 = scalar_select %p236, %s235, 3
          %s238 = smul.addr %s237, 2
          %s239 = scalar_lea.vmem %s0, %s238
          %s240 = smul.u32 2, %s17
        $region44: #{tpu_custom_call.1} parent=39 // pred_fallthru
          _
      $region40: #{tpu_custom_call.1} parent=5 // pred_fallthru
        _
      %p241 = scmp.le.s32.totalorder 1, %s17
      %p242 = scmp.lt.s32.totalorder %s17, 3
      %p243 = pnand %p241, %p242
      %p244 = pneg %p243
      // Predicated region
      $region45: #{tpu_custom_call.1} parent=5 // pred_check
        _
      $region46: #{tpu_custom_call.1} parent=5 // pred_check_branch
        %246 = sbr.rel (%p243) target = $region48
      $region47: #{tpu_custom_call.1} parent=5 // pred_region
        %s247 = ssub.s32 %s17, 1
        %s248 = smul.u32 2, %s22
        %p249 = scmp.lt.s32.totalorder %s248, 3
        %s250 = scalar_select %p249, %s248, 3
        %s251 = smul.addr %s250, 2
        %s252 = scalar_lea.vmem %s0, %s251
        %p253 = pneg %p43
        %p254 = pneg %p40
        %p255 = pneg %p64
        %p256 = pneg %p61
        %p257 = pneg %p85
        %p258 = pneg %p82
        %p259 = pneg %p106
        %p260 = pneg %p103
        %p261 = pneg %p127
        %p262 = pneg %p124
        %p263 = pneg %p148
        %p264 = pneg %p145
        %p265 = pneg %p169
        %p266 = pneg %p166
        %p267 = pneg %p195
        %p268 = pneg %p192
        %s269 = sand.u32 %s182, 1
        %s270 = scalar_lea.sflag [#allocation4], %s269
        %s271 = sand.u32 %s182, 1
        %s272 = smul.addr %s271, 2
        %s273 = scalar_lea.vmem [#allocation3], %s272
        %s274 = smul.u32 2, %s22
        %p275 = scmp.lt.s32.totalorder %s274, 3
        %s276 = scalar_select %p275, %s274, 3
        %s277 = smul.addr %s276, 2
        %s278 = scalar_lea.vmem %s0, %s277
        %s279 = smul.u32 2, %s22
        %s280 = smul.u32 2, %s22
        %v281 = vld [vmem:[%s1] sm:$0xff]
        %v282 = vld [vmem:[%s1 + $0x8] sm:$0xff]
        %v283 = vld [vmem:[%s1 + $0x10] sm:$0xff]
        %v284 = vld [vmem:[%s1 + $0x18] sm:$0x1]
        %v285 = vld [vmem:[%s2] sm:$0xff]
        %v286 = vld [vmem:[%s2 + $0x8] sm:$0xff]
        %v287 = vld [vmem:[%s2 + $0x10] sm:$0xff]
        %v288 = vld [vmem:[%s2 + $0x18] sm:$0x1]
        %v289 = vld [vmem:[%s3] sm:$0xff]
        %v290 = vld [vmem:[%s3 + $0x8] sm:$0xff]
        %v291 = vld [vmem:[%s3 + $0x10] sm:$0xff]
        %v292 = vld [vmem:[%s3 + $0x18] sm:$0x1]
        %v293 = vld [vmem:[%s4] sm:$0xff]
        %v294 = vld [vmem:[%s4 + $0x8] sm:$0xff]
        %v295 = vld [vmem:[%s4 + $0x10] sm:$0xff]
        %v296 = vld [vmem:[%s4 + $0x18] sm:$0x1]
        %v297 = vld [vmem:[%s5] sm:$0x1]
        %s298 = sld [smem:[#allocation2]]
        %v299 = vld [vmem:[%s278] sm:$0xf]
        %301 = vset.pattern.permute.xlu0 0
        %302 = vperm.xlu0 %301, %v285
        %v303 = vpop.permute.xlu0 %302
        %306 = vset.pattern.permute.xlu0 0
        %307 = vperm.xlu0 %306, %v286
        %v308 = vpop.permute.xlu0 %307
        %311 = vset.pattern.permute.xlu0 0
        %312 = vperm.xlu0 %311, %v287
        %v313 = vpop.permute.xlu0 %312
        %316 = vset.pattern.permute.xlu0 0
        %317 = vperm.xlu0 %316, %v288
        %v318 = vpop.permute.xlu0 %317
        %v322 = vunpack.c.l.s4 1983009808
        %v323 = vunpack.c.0.s8 %v322
        %v324 = vlaneseq
        %v325 = vshrl.u32 %v324, 7
        %v326 = vsub.s32 %v323, %v325
        %v327 = vrot.slane %v299, %v326
        %v328 = vcombine.high %v327, %v327
        %vm329 = vcmask 15360
        %v331 = vsel %vm329, %v281, 0
        %v334 = vsel %vm329, %v282, 0
        %v337 = vsel %vm329, %v283, 0
        %v340 = vsel %vm329, %v284, 0
        %vm342 = vcmask 1041408
        %v343 = vsel %vm342, %v327, 0
        %v345 = vsel %vm342, %v328, 0
        %347 = vmatprep.subr.mxu0 %v345
        %348 = vmatpush1.msra.mxu0 %v343
        %349 = vmatprep.subr.mxu0 0.0
        %350 = vmatpush1.msra.mxu0 0.0
        %351 = vmatprep.subr.mxu0 0.0
        %352 = vmatpush1.msra.mxu0 0.0
        %353 = vmatprep.subr.mxu0 0.0
        %354 = vmatpush1.msra.mxu0 0.0
        %355 = vmatprep.subr.mxu0 0.0
        %356 = vmatpush1.msra.mxu0 0.0
        %357 = vmatprep.subr.mxu0 0.0
        %358 = vmatpush1.msra.mxu0 0.0
        %359 = vmatprep.subr.mxu0 0.0
        %360 = vmatpush1.msra.mxu0 0.0
        %361 = vmatprep.subr.mxu0 0.0
        %362 = vmatpush1.msra.mxu0 0.0
        %363 = vmatprep.subr.mxu0 0.0
        %364 = vmatpush1.msra.mxu0 0.0
        %365 = vmatprep.subr.mxu0 0.0
        %366 = vmatpush1.msra.mxu0 0.0
        %367 = vmatprep.subr.mxu0 0.0
        %368 = vmatpush1.msra.mxu0 0.0
        %369 = vmatprep.subr.mxu0 0.0
        %370 = vmatpush1.msra.mxu0 0.0
        %371 = vmatprep.subr.mxu0 0.0
        %372 = vmatpush1.msra.mxu0 0.0
        %373 = vmatprep.subr.mxu0 0.0
        %374 = vmatpush1.msra.mxu0 0.0
        %375 = vmatprep.subr.mxu0 0.0
        %376 = vmatpush1.msra.mxu0 0.0
        %377 = vmatprep.subr.mxu0 0.0
        %378 = vmatpush1.msra.mxu0 0.0
        %379 = vmatprep.subr.mxu0 0.0
        %380 = vmatpush1.msra.mxu0 0.0
        %381 = vmatprep.subr.mxu0 0.0
        %382 = vmatpush1.msra.mxu0 0.0
        %383 = vmatprep.subr.mxu0 0.0
        %384 = vmatpush1.msra.mxu0 0.0
        %385 = vmatprep.subr.mxu0 0.0
        %386 = vmatpush1.msra.mxu0 0.0
        %387 = vmatprep.subr.mxu0 0.0
        %388 = vmatpush1.msra.mxu0 0.0
        %389 = vmatprep.subr.mxu0 0.0
        %390 = vmatpush1.msra.mxu0 0.0
        %391 = vmatprep.subr.mxu0 0.0
        %392 = vmatpush1.msra.mxu0 0.0
        %393 = vmatprep.subr.mxu0 0.0
        %394 = vmatpush1.msra.mxu0 0.0
        %395 = vmatprep.subr.mxu0 0.0
        %396 = vmatpush1.msra.mxu0 0.0
        %397 = vmatprep.subr.mxu0 0.0
        %398 = vmatpush1.msra.mxu0 0.0
        %399 = vmatprep.subr.mxu0 0.0
        %400 = vmatpush1.msra.mxu0 0.0
        %401 = vmatprep.subr.mxu0 0.0
        %402 = vmatpush1.msra.mxu0 0.0
        %403 = vmatprep.subr.mxu0 0.0
        %404 = vmatpush1.msra.mxu0 0.0
        %405 = vmatprep.subr.mxu0 0.0
        %406 = vmatpush1.msra.mxu0 0.0
        %407 = vmatprep.subr.mxu0 0.0
        %408 = vmatpush1.msra.mxu0 0.0
        %409 = vmatprep.subr.mxu0 0.0
        %410 = vmatpush1.msra.mxu0 0.0
        %411 = vmatprep.mubr.f32.mxu0 0.0
        %412 = vmatmul.mubr.f32.gmra.mrb[0].mxu0 %v331
        %v413 = vpop.f32.mrb[0].mxu0
        %v414 = vadd.f32 %v303, %v413
        %v415 = vpop.f32.mrb[0].mxu0
        %v416 = vadd.f32 %v303, %v415
        %417 = vmatprep.mubr.f32.mxu0 0.0
        %418 = vmatmul.mubr.f32.gmra.mrb[0].mxu0 %v334
        %v419 = vpop.f32.mrb[0].mxu0
        %v420 = vadd.f32 %v308, %v419
        %v421 = vpop.f32.mrb[0].mxu0
        %v422 = vadd.f32 %v308, %v421
        %423 = vmatprep.mubr.f32.mxu0 0.0
        %424 = vmatmul.mubr.f32.gmra.mrb[0].mxu0 %v337
        %v425 = vpop.f32.mrb[0].mxu0
        %v426 = vadd.f32 %v313, %v425
        %v427 = vpop.f32.mrb[0].mxu0
        %v428 = vadd.f32 %v313, %v427
        %429 = vmatprep.mubr.f32.mxu0 0.0
        %430 = vmatmul.mubr.f32.gmra.mrb[0].mxu0 %v340
        %v431 = vpop.f32.mrb[0].mxu0
        %v432 = vadd.f32 %v318, %v431
        %v433 = vpop.f32.mrb[0].mxu0
        %v434 = vadd.f32 %v318, %v433
        %435 = vdwg.mxu0
        %v436 = vmax.f32 %v414, 0.0
        %v437 = vmax.f32 %v416, 0.0
        %v438 = vmax.f32 %v420, 0.0
        %v439 = vmax.f32 %v422, 0.0
        %v440 = vmax.f32 %v426, 0.0
        %v441 = vmax.f32 %v428, 0.0
        %v442 = vmax.f32 %v432, 0.0
        %v443 = vmax.f32 %v434, 0.0
        %445 = vset.pattern.permute.xlu0 0
        %446 = vperm.xlu0 %445, %v293
        %v447 = vpop.permute.xlu0 %446
        %450 = vset.pattern.permute.xlu0 0
        %451 = vperm.xlu0 %450, %v294
        %v452 = vpop.permute.xlu0 %451
        %455 = vset.pattern.permute.xlu0 0
        %456 = vperm.xlu0 %455, %v295
        %v457 = vpop.permute.xlu0 %456
        %460 = vset.pattern.permute.xlu0 0
        %461 = vperm.xlu0 %460, %v296
        %v462 = vpop.permute.xlu0 %461
        %vm464 = vcmask 203776
        %v466 = vsel %vm464, %v289, 0
        %v469 = vsel %vm464, %v290, 0
        %v472 = vsel %vm464, %v291, 0
        %v475 = vsel %vm464, %v292, 0
        %vm477 = vcmask 1040384
        %v479 = vsel %vm477, %v442, 0
        %v482 = vsel %vm477, %v443, 0
        %484 = vmatprep.subr.mxu0 %v437
        %485 = vmatpush1.msra.mxu0 %v436
        %486 = vmatprep.subr.mxu0 %v439
        %487 = vmatpush1.msra.mxu0 %v438
        %488 = vmatprep.subr.mxu0 %v441
        %489 = vmatpush1.msra.mxu0 %v440
        %490 = vmatprep.subr.mxu0 %v482
        %491 = vmatpush1.msra.mxu0 %v479
        %492 = vmatprep.subr.mxu0 0.0
        %493 = vmatpush1.msra.mxu0 0.0
        %494 = vmatprep.subr.mxu0 0.0
        %495 = vmatpush1.msra.mxu0 0.0
        %496 = vmatprep.subr.mxu0 0.0
        %497 = vmatpush1.msra.mxu0 0.0
        %498 = vmatprep.subr.mxu0 0.0
        %499 = vmatpush1.msra.mxu0 0.0
        %500 = vmatprep.subr.mxu0 0.0
        %501 = vmatpush1.msra.mxu0 0.0
        %502 = vmatprep.subr.mxu0 0.0
        %503 = vmatpush1.msra.mxu0 0.0
        %504 = vmatprep.subr.mxu0 0.0
        %505 = vmatpush1.msra.mxu0 0.0
        %506 = vmatprep.subr.mxu0 0.0
        %507 = vmatpush1.msra.mxu0 0.0
        %508 = vmatprep.subr.mxu0 0.0
        %509 = vmatpush1.msra.mxu0 0.0
        %510 = vmatprep.subr.mxu0 0.0
        %511 = vmatpush1.msra.mxu0 0.0
        %512 = vmatprep.subr.mxu0 0.0
        %513 = vmatpush1.msra.mxu0 0.0
        %514 = vmatprep.subr.mxu0 0.0
        %515 = vmatpush1.msra.mxu0 0.0
        %516 = vmatprep.subr.mxu0 0.0
        %517 = vmatpush1.msra.mxu0 0.0
        %518 = vmatprep.subr.mxu0 0.0
        %519 = vmatpush1.msra.mxu0 0.0
        %520 = vmatprep.subr.mxu0 0.0
        %521 = vmatpush1.msra.mxu0 0.0
        %522 = vmatprep.subr.mxu0 0.0
        %523 = vmatpush1.msra.mxu0 0.0
        %524 = vmatprep.subr.mxu0 0.0
        %525 = vmatpush1.msra.mxu0 0.0
        %526 = vmatprep.subr.mxu0 0.0
        %527 = vmatpush1.msra.mxu0 0.0
        %528 = vmatprep.subr.mxu0 0.0
        %529 = vmatpush1.msra.mxu0 0.0
        %530 = vmatprep.subr.mxu0 0.0
        %531 = vmatpush1.msra.mxu0 0.0
        %532 = vmatprep.subr.mxu0 0.0
        %533 = vmatpush1.msra.mxu0 0.0
        %534 = vmatprep.subr.mxu0 0.0
        %535 = vmatpush1.msra.mxu0 0.0
        %536 = vmatprep.subr.mxu0 0.0
        %537 = vmatpush1.msra.mxu0 0.0
        %538 = vmatprep.subr.mxu0 0.0
        %539 = vmatpush1.msra.mxu0 0.0
        %540 = vmatprep.subr.mxu0 0.0
        %541 = vmatpush1.msra.mxu0 0.0
        %542 = vmatprep.subr.mxu0 0.0
        %543 = vmatpush1.msra.mxu0 0.0
        %544 = vmatprep.subr.mxu0 0.0
        %545 = vmatpush1.msra.mxu0 0.0
        %546 = vmatprep.subr.mxu0 0.0
        %547 = vmatpush1.msra.mxu0 0.0
        %548 = vmatprep.mubr.f32.mxu0 0.0
        %549 = vmatmul.mubr.f32.gmra.mrb[0].mxu0 %v466
        %v550 = vpop.f32.mrb[0].mxu0
        %v551 = vadd.f32 %v447, %v550
        %v552 = vpop.f32.mrb[0].mxu0
        %v553 = vadd.f32 %v447, %v552
        %554 = vmatprep.mubr.f32.mxu0 0.0
        %555 = vmatmul.mubr.f32.gmra.mrb[0].mxu0 %v469
        %v556 = vpop.f32.mrb[0].mxu0
        %v557 = vadd.f32 %v452, %v556
        %v558 = vpop.f32.mrb[0].mxu0
        %v559 = vadd.f32 %v452, %v558
        %560 = vmatprep.mubr.f32.mxu0 0.0
        %561 = vmatmul.mubr.f32.gmra.mrb[0].mxu0 %v472
        %v562 = vpop.f32.mrb[0].mxu0
        %v563 = vadd.f32 %v457, %v562
        %v564 = vpop.f32.mrb[0].mxu0
        %v565 = vadd.f32 %v457, %v564
        %566 = vmatprep.mubr.f32.mxu0 0.0
        %567 = vmatmul.mubr.f32.gmra.mrb[0].mxu0 %v475
        %v568 = vpop.f32.mrb[0].mxu0
        %v569 = vadd.f32 %v462, %v568
        %v570 = vpop.f32.mrb[0].mxu0
        %v571 = vadd.f32 %v462, %v570
        %572 = vdwg.mxu0
        %v573 = vmax.f32 %v551, 0.0
        %v574 = vmax.f32 %v553, 0.0
        %v575 = vmax.f32 %v557, 0.0
        %v576 = vmax.f32 %v559, 0.0
        %v577 = vmax.f32 %v563, 0.0
        %v578 = vmax.f32 %v565, 0.0
        %v579 = vmax.f32 %v569, 0.0
        %v580 = vmax.f32 %v571, 0.0
        %v581 = vstv %s298
        %v583 = vsel %vm464, %v297, 0
        %v586 = vsel %vm477, %v579, 0
        %v589 = vsel %vm477, %v580, 0
        %591 = vmatprep.subr.mxu0 %v574
        %592 = vmatpush1.msra.mxu0 %v573
        %593 = vmatprep.subr.mxu0 %v576
        %594 = vmatpush1.msra.mxu0 %v575
        %595 = vmatprep.subr.mxu0 %v578
        %596 = vmatpush1.msra.mxu0 %v577
        %597 = vmatprep.subr.mxu0 %v589
        %598 = vmatpush1.msra.mxu0 %v586
        %599 = vmatprep.subr.mxu0 0.0
        %600 = vmatpush1.msra.mxu0 0.0
        %601 = vmatprep.subr.mxu0 0.0
        %602 = vmatpush1.msra.mxu0 0.0
        %603 = vmatprep.subr.mxu0 0.0
        %604 = vmatpush1.msra.mxu0 0.0
        %605 = vmatprep.subr.mxu0 0.0
        %606 = vmatpush1.msra.mxu0 0.0
        %607 = vmatprep.subr.mxu0 0.0
        %608 = vmatpush1.msra.mxu0 0.0
        %609 = vmatprep.subr.mxu0 0.0
        %610 = vmatpush1.msra.mxu0 0.0
        %611 = vmatprep.subr.mxu0 0.0
        %612 = vmatpush1.msra.mxu0 0.0
        %613 = vmatprep.subr.mxu0 0.0
        %614 = vmatpush1.msra.mxu0 0.0
        %615 = vmatprep.subr.mxu0 0.0
        %616 = vmatpush1.msra.mxu0 0.0
        %617 = vmatprep.subr.mxu0 0.0
        %618 = vmatpush1.msra.mxu0 0.0
        %619 = vmatprep.subr.mxu0 0.0
        %620 = vmatpush1.msra.mxu0 0.0
        %621 = vmatprep.subr.mxu0 0.0
        %622 = vmatpush1.msra.mxu0 0.0
        %623 = vmatprep.subr.mxu0 0.0
        %624 = vmatpush1.msra.mxu0 0.0
        %625 = vmatprep.subr.mxu0 0.0
        %626 = vmatpush1.msra.mxu0 0.0
        %627 = vmatprep.subr.mxu0 0.0
        %628 = vmatpush1.msra.mxu0 0.0
        %629 = vmatprep.subr.mxu0 0.0
        %630 = vmatpush1.msra.mxu0 0.0
        %631 = vmatprep.subr.mxu0 0.0
        %632 = vmatpush1.msra.mxu0 0.0
        %633 = vmatprep.subr.mxu0 0.0
        %634 = vmatpush1.msra.mxu0 0.0
        %635 = vmatprep.subr.mxu0 0.0
        %636 = vmatpush1.msra.mxu0 0.0
        %637 = vmatprep.subr.mxu0 0.0
        %638 = vmatpush1.msra.mxu0 0.0
        %639 = vmatprep.subr.mxu0 0.0
        %640 = vmatpush1.msra.mxu0 0.0
        %641 = vmatprep.subr.mxu0 0.0
        %642 = vmatpush1.msra.mxu0 0.0
        %643 = vmatprep.subr.mxu0 0.0
        %644 = vmatpush1.msra.mxu0 0.0
        %645 = vmatprep.subr.mxu0 0.0
        %646 = vmatpush1.msra.mxu0 0.0
        %647 = vmatprep.subr.mxu0 0.0
        %648 = vmatpush1.msra.mxu0 0.0
        %649 = vmatprep.subr.mxu0 0.0
        %650 = vmatpush1.msra.mxu0 0.0
        %651 = vmatprep.subr.mxu0 0.0
        %652 = vmatpush1.msra.mxu0 0.0
        %653 = vmatprep.subr.mxu0 0.0
        %654 = vmatpush1.msra.mxu0 0.0
        %655 = vmatprep.mubr.f32.mxu0 0.0
        %656 = vmatmul.mubr.f32.gmra.mrb[0].mxu0 %v583
        %v657 = vpop.f32.mrb[0].mxu0
        %v658 = vadd.f32 %v581, %v657
        %v659 = vpop.f32.mrb[0].mxu0
        %v660 = vadd.f32 %v581, %v659
        %661 = vdwg.mxu0
        %v662 = vxor.u32 %v658, 2147483648
        %v663 = vxor.u32 %v660, 2147483648
        %v664 = vmul.f32 %v662, 1.442695
        %v665 = vpow.pop %v664
        %v666 = vmul.f32 %v663, 1.442695
        %v667 = vpow.pop %v666
        %v668 = vadd.f32 %v665, 1.0
        %v669 = vadd.f32 %v667, 1.0
        %v670 = vrcp.pop %v668
        %v671 = vmul.f32 1.0, %v670
        %v672 = vrcp.pop %v669
        %v673 = vmul.f32 1.0, %v672
        %v676 = vcombine.low %v671, %v673
        %v678 = vunpack.c.l.s4 1966171168
        %v679 = vunpack.c.0.s8 %v678
        %v680 = vlaneseq
        %v681 = vshrl.u32 %v680, 7
        %v682 = vsub.s32 %v679, %v681
        %v683 = vrot.slane %v676, %v682
        %v685 = vunpack.c.l.s4 1966171168
        %v686 = vunpack.c.0.s8 %v685
        %v687 = vlaneseq
        %v688 = vshrl.u32 %v687, 7
        %v689 = vsub.s32 %v686, %v688
        %v690 = vrot.slane %v683, %v689
        %v692 = vlaneseq
        %vm693 = vcmp.ge.s32.totalorder %v692, 0
        %vm694 = vcmp.lt.s32.totalorder %v692, 256
        %vm695 = vmand %vm693, %vm694
        %696 = vst.msk [vmem:[%s273] sm:$0x3] %vm695, %v690
        %s697 = sand.u32 %s182, 1
        %s698 = scalar_lea.sflag [#allocation4], %s697
        %s699 = sand.u32 %s182, 1
        %s700 = smul.addr %s699, 2
        %s701 = scalar_lea.vmem [#allocation3], %s700
        // Predicated region
        $region49: #{tpu_custom_call.1} parent=47 // pred_check
          %p702 = pneg %p192
        $region50: #{tpu_custom_call.1} parent=47 // pred_check_branch
          %704 = sbr.rel (%p702) target = $region52
        $region51: #{tpu_custom_call.1} parent=47 // pred_region
          %s705 = smul.u32 2, %s22
          %s707 = ssub.s32 32, 32
          %708 = vsyncadd %s698, %s707
          %s709 = smul.addr %s705, 16
          %s710 = scalar_lea.hbm %s7, %s709
          %s712 = sshll.u32 %s701, 4
          %s713 = int_to_ptr.vmem [resolvable:$true] %s712
          %715 = dma.vmem_to_hbm [thread:$0]  %s713, 32, %s710, %s698
        $region52: #{tpu_custom_call.1} parent=47 // pred_fallthru
          _
      $region48: #{tpu_custom_call.1} parent=5 // pred_fallthru
        _
      %p716 = scmp.le.s32.totalorder 2, %s17
      // Predicated region
      $region53: #{tpu_custom_call.1} parent=5 // pred_check
        %p717 = pneg %p716
      $region54: #{tpu_custom_call.1} parent=5 // pred_check_branch
        %719 = sbr.rel (%p717) target = $region56
      $region55: #{tpu_custom_call.1} parent=5 // pred_region
        %s720 = ssub.s32 %s17, 2
        // Predicated region
        $region57: #{tpu_custom_call.1} parent=55 // pred_check
          %p721 = pneg %p198
        $region58: #{tpu_custom_call.1} parent=55 // pred_check_branch
          %723 = sbr.rel (%p721) target = $region60
        $region59: #{tpu_custom_call.1} parent=55 // pred_region
          %s724 = sand.u32 %s183, 1
          %s725 = scalar_lea.sflag [#allocation4], %s724
          %s726 = sand.u32 %s183, 1
          %s727 = smul.addr %s726, 2
          %s728 = scalar_lea.vmem [#allocation3], %s727
          %729 = dma.done %s725, 32
        $region60: #{tpu_custom_call.1} parent=55 // pred_fallthru
          _
      $region56: #{tpu_custom_call.1} parent=5 // pred_fallthru
        _
    $region6: #{tpu_custom_call.1} parent=1 // loop_footer
      %s21 = sadd.s32 1, %s17
    $region7: #{tpu_custom_call.1} parent=1 // loop_footer_branch
      %16 = sbr.rel target = $region3
    $region8: #{tpu_custom_call.1} parent=1 // loop_exit
      _
    %730 = vsyncpa [#allocation4], 1
    %s731 = scalar_lea.sflag [#allocation4], 1
    %732 = vsyncpa %s731, 1

</llo_original>
